<compile_context>
chip_gen: v7x
topology: tpu7x:2x2x1
jax: 0.10.0
libtpu: 0.0.40
codegen_flags: <defaults>
</compile_context>

<pallas_src>
import jax
import jax.numpy as jnp
from jax import lax
from jax.experimental import pallas as pl
from jax.experimental.pallas import tpu as pltpu


K_IN = 10
N_OUT = 200
_LANE = 128
K_PAD = _LANE                                     # 10 -> 128 (lane multiple)
N_PAD = ((N_OUT + _LANE - 1) // _LANE) * _LANE    # 200 -> 256 (lane multiple)


def _prepare_fused_params(w1, w2, b2):
    """Transpose PyTorch-layout (N, K) weights to (K, N), zero-pad K -> K_PAD and
    N -> N_PAD, and fuse both layers into one (K_PAD, 2*N_PAD) matrix.  All pad
    rows/columns are exactly zero, so they contribute nothing to either matmul."""
    k = w1.shape[1]
    wf = jnp.zeros((K_PAD, 2 * N_PAD), jnp.float32)
    wf = wf.at[:k, :N_OUT].set(w1.T.astype(jnp.float32))
    wf = wf.at[:k, N_PAD:N_PAD + N_OUT].set(w2.T.astype(jnp.float32))
    b2row = jnp.zeros((1, N_PAD), jnp.float32)
    b2row = b2row.at[0, :N_OUT].set(b2.astype(jnp.float32))
    return wf, b2row


def _m_fused_kernel(inp_ref, w_ref, b_ref, out_ref):
    # inp_ref: (R, K_PAD)      R = instances_per_step * batch rows, zero-padded K
    # w_ref:   (K_PAD, 2*N_PAD) fused [w1.T | w2.T] (VMEM-resident across steps)
    # b_ref:   (1, N_PAD)       fc2 bias row (zero-padded)
    # out_ref: (R, R)           whole-step X1 @ X2.T; the per-instance b x b
    #                           outputs are its block-diagonal blocks.
    fused = jnp.dot(inp_ref[...], w_ref[...],
                    preferred_element_type=jnp.float32)            # (R, 2*N_PAD)
    x1 = fused[:, :N_PAD]                                          # lane-aligned slice
    x2 = fused[:, N_PAD:] + b_ref[...]                             # bias on fc2 half only
    # One MXU-native NT matmul over the whole step (contract last dims).
    # Zero pad columns of x1/x2 contribute nothing.
    out_ref[...] = lax.dot_general(x1, x2, (((1,), (1,)), ((), ())),
                                   preferred_element_type=jnp.float32)


def _pick_instances_per_step(g, b, max_rows=512):
    """Pick instances per grid step.  Priority: >= 2 even steps (both v7x TCs get
    work) > 256-row MXU M-fill (v6e/v7x) > 128-row fill (v5e) > larger blocks."""
    divs = [d for d in range(1, g + 1)
            if g % d == 0 and d * b <= max_rows
            and (g // d == 1 or (d * b) % 8 == 0)]     # sublane-aligned blocks
    if not divs:
        divs = [g]

    def score(gi):
        rows, steps = gi * b, g // gi
        return (steps >= 2 and steps % 2 == 0, rows % 256 == 0,
                rows % 128 == 0, rows)

    return max(divs, key=score)


def m_forward_batched(inps, w1, w2, b2, *, instances_per_step=None):
    """inps: (G, B, K) -> (G, B, B).  G independent instances of the module
    forward, amortized over one pallas_call with a parallel grid axis."""
    g, b, k = inps.shape
    assert k == w1.shape[1] == w2.shape[1] == K_IN
    wf, b2row = _prepare_fused_params(w1, w2, b2)

    gi = instances_per_step if instances_per_step is not None else _pick_instances_per_step(g, b)
    assert g % gi == 0
    steps = g // gi
    rows = gi * b
    assert steps == 1 or rows % 8 == 0, "per-step row count must be sublane aligned"

    # Wrapper-side layout plumbing: stack all instance rows and zero-pad K so the
    # per-step LHS block is lane-dense and the contraction dim is MXU-native.
    inp2d = jnp.zeros((g * b, K_PAD), jnp.float32)
    inp2d = inp2d.at[:, :k].set(inps.reshape(g * b, k).astype(jnp.float32))

    out_full = pl.pallas_call(
        _m_fused_kernel,
        out_shape=jax.ShapeDtypeStruct((g * b, rows), jnp.float32),
        grid=(steps,),
        in_specs=[
            pl.BlockSpec((rows, K_PAD), lambda s: (s, 0)),       # per-step rows
            pl.BlockSpec((K_PAD, 2 * N_PAD), lambda s: (0, 0)),  # shared fused weights
            pl.BlockSpec((1, N_PAD), lambda s: (0, 0)),          # shared bias row
        ],
        out_specs=pl.BlockSpec((rows, rows), lambda s: (s, 0)),  # lane-dense slab
        compiler_params=pltpu.CompilerParams(
            dimension_semantics=("parallel",)),                  # v7x: 2 TCs
    )(inp2d, wf, b2row)

    # Per-instance outputs are the b x b diagonal blocks of each step's slab.
    full = out_full.reshape(steps, gi, b, gi, b)
    diag = jnp.diagonal(full, axis1=1, axis2=3)        # (steps, b, b, gi)
    return jnp.moveaxis(diag, -1, 1).reshape(g, b, b)  # (G, B, B)


def m_forward(inp, w1, w2, b2):
    """Module-equivalent forward.  inp: (B, K); w1, w2: (N, K) PyTorch layout; b2: (N,)."""
    return m_forward_batched(inp[None], w1, w2, b2)[0]


if __name__ == "__main__":
    B, K, N = 8, 10, 200  # batch=8, in_features=10, out_features=200

    key = jax.random.PRNGKey(0)
    k_inp, k_w1, k_w2, k_b2, k_big = jax.random.split(key, 5)

    # Deterministic synthetic parameters (PyTorch Linear weight layout: (out, in)).
    inp = jax.random.normal(k_inp, (B, K), dtype=jnp.float32)
    w1 = jax.random.normal(k_w1, (N, K), dtype=jnp.float32) * 0.1
    w2 = jax.random.normal(k_w2, (N, K), dtype=jnp.float32) * 0.1
    b2 = jax.random.normal(k_b2, (N,), dtype=jnp.float32) * 0.1

    def ref_forward(x):
        x1 = jnp.dot(x, w1.T, precision=lax.Precision.HIGHEST)
        x2 = jnp.dot(x, w2.T, precision=lax.Precision.HIGHEST) + b2
        return jnp.dot(x1, x2.T, precision=lax.Precision.HIGHEST)

    # Tolerance sized to absorb worst-case reduced-precision MXU passes on the
    # 200-term contraction (~1e-2 abs); structural bugs give O(1) errors and
    # are still caught.  Observed error with full-f32 contraction is ~1e-5.
    RTOL = ATOL = 2e-2

    # 1) Module-equivalent single-instance forward (literal M.forward).
    out = m_forward(inp, w1, w2, b2)
    jax.block_until_ready(out)
    assert out.shape == (B, B)
    assert jnp.allclose(out, ref_forward(inp), rtol=RTOL, atol=ATOL)

    # 2) Batched throughput path: 64 independent instances -> gi=32 per step
    #    (256 MXU rows per fused dot) and 2 parallel grid steps (v7x megacore).
    G = 64
    inps = jax.random.normal(k_big, (G, B, K), dtype=jnp.float32)
    outs = m_forward_batched(inps, w1, w2, b2)
    jax.block_until_ready(outs)
    refs = jax.vmap(ref_forward)(inps)
    assert outs.shape == (G, B, B)
    assert jnp.allclose(outs, refs, rtol=RTOL, atol=ATOL)

    print("KERNEL_OK")
</pallas_src>

<mosaic_0001>
module attributes {stable_mosaic.version = 11 : i64} {
  func.func @_m_fused_kernel(%arg0: i32, %arg1: memref<8x128xf32, #tpu.memory_space<vmem>>, %arg2: memref<128x512xf32, #tpu.memory_space<vmem>>, %arg3: memref<1x256xf32, #tpu.memory_space<vmem>>, %arg4: memref<8x8xf32, #tpu.memory_space<vmem>>) attributes {dimension_semantics = [#tpu.dimension_semantics<parallel>], iteration_bounds = array<i64: 1>, scalar_prefetch = 0 : i64, scratch_operands = 0 : i64, tpu.core_type = #tpu.core_type<tc>, window_params = [{transform_indices = @transform_0, window_bounds = array<i64: 8, 128>}, {pipeline_mode = #tpu.pipeline_mode<synchronous>, transform_indices = @transform_1, window_bounds = array<i64: 128, 512>}, {pipeline_mode = #tpu.pipeline_mode<synchronous>, transform_indices = @transform_2, window_bounds = array<i64: 1, 256>}, {transform_indices = @transform_3, window_bounds = array<i64: 8, 8>}]} {
    %c0 = arith.constant 0 : index
    %c0_0 = arith.constant 0 : index
    %0 = vector.load %arg1[%c0, %c0_0] : memref<8x128xf32, #tpu.memory_space<vmem>>, vector<8x128xf32>
    %c0_1 = arith.constant 0 : index
    %c0_2 = arith.constant 0 : index
    %1 = vector.load %arg2[%c0_1, %c0_2] : memref<128x512xf32, #tpu.memory_space<vmem>>, vector<128x512xf32>
    %cst = arith.constant dense<0.000000e+00> : vector<8x512xf32>
    %2 = tpu.matmul %0, %1, %cst {dimension_numbers = #tpu.dot_dimension_numbers<[1], [0], [0], [1], [0, 0, 1, 1], [], []>} : vector<8x128xf32>, vector<128x512xf32>, vector<8x512xf32> -> vector<8x512xf32>
    %3 = vector.extract_strided_slice %2 {offsets = [0, 0], sizes = [8, 256], strides = [1, 1]} : vector<8x512xf32> to vector<8x256xf32>
    %4 = vector.extract_strided_slice %2 {offsets = [0, 256], sizes = [8, 256], strides = [1, 1]} : vector<8x512xf32> to vector<8x256xf32>
    %c0_3 = arith.constant 0 : index
    %c0_4 = arith.constant 0 : index
    %5 = vector.load %arg3[%c0_3, %c0_4] : memref<1x256xf32, #tpu.memory_space<vmem>>, vector<1x256xf32>
    %6 = vector.broadcast %5 : vector<1x256xf32> to vector<8x256xf32>
    %7 = arith.addf %4, %6 : vector<8x256xf32>
    %cst_5 = arith.constant dense<0.000000e+00> : vector<8x8xf32>
    %8 = tpu.matmul %3, %7, %cst_5 {dimension_numbers = #tpu.dot_dimension_numbers<[1], [1], [0], [0], [0, 0, 1, 0], [], []>} : vector<8x256xf32>, vector<8x256xf32>, vector<8x8xf32> -> vector<8x8xf32>
    %c0_6 = arith.constant 0 : index
    %c0_7 = arith.constant 0 : index
    %9 = vector.load %arg4[%c0_6, %c0_7] : memref<8x8xf32, #tpu.memory_space<vmem>>, vector<8x8xf32>
    tpu.vector_store %arg4[%c0_6, %c0_7], %8 {strides = array<i32>} : memref<8x8xf32, #tpu.memory_space<vmem>>, vector<8x8xf32>,
    return
  }
  func.func @transform_0(%arg0: i32) -> (i32, i32) {
    %c0_i32 = arith.constant 0 : i32
    %c0_i32_0 = arith.constant 0 : i32
    return %arg0, %c0_i32 : i32, i32
  }
  func.func @transform_1(%arg0: i32) -> (i32, i32) {
    %c0_i32 = arith.constant 0 : i32
    %c0_i32_0 = arith.constant 0 : i32
    %c0_i32_1 = arith.constant 0 : i32
    return %c0_i32, %c0_i32_0 : i32, i32
  }
  func.func @transform_2(%arg0: i32) -> (i32, i32) {
    %c0_i32 = arith.constant 0 : i32
    %c0_i32_0 = arith.constant 0 : i32
    %c0_i32_1 = arith.constant 0 : i32
    return %c0_i32, %c0_i32_0 : i32, i32
  }
  func.func @transform_3(%arg0: i32) -> (i32, i32) {
    %c0_i32 = arith.constant 0 : i32
    %c0_i32_0 = arith.constant 0 : i32
    return %arg0, %c0_i32 : i32, i32
  }
}

</mosaic_0001>

<llo_original>
// kernel: tpu_custom_call.1
$region0: #{tpu_custom_call.1}
  #allocation0 [shape = 'u32[]', space=smem, size = 0x4, offset = 0x4, fixed_abs, tag = 'smem constant byte address 0x4 - core index']
  #allocation1 [shape = 'u32[144,128]{1,0:T(1,128)}', space=vmem, size = 0x12000, scoped, tag = 'internal scratch']
  %s0 = inlined_call_operand.hbm [shape: f32[8,128], index: 0, kind: input, shape index: {}]
  %s1 = inlined_call_operand.hbm [shape: f32[128,512], index: 1, kind: input, shape index: {}]
  %s2 = inlined_call_operand.vmem [shape: f32[1,256], index: 2, kind: input, shape index: {}]
  %s3 = inlined_call_operand.hbm [shape: f32[8,8], index: 3, kind: output, shape index: {}]
  %s4 = sld [smem:[#allocation0]]
  $region30: #{tpu_custom_call.1} parent=0
    _
  %s6 = ssub.s32 1, %s4
  %s7 = scalar_select 0, %s6, %s4
  $region1: #{tpu_custom_call.1} parent=0
    #allocation2 [shape = 'u8[4096]{0}', space=vmem, size = 0x1000, scoped, tag = 'input window, operand 0, single buffered']
    #allocation3 [shape = 's32[1]{0}', space=sflag, size = 0x4, scoped, tag = 'scoped memory for tpu_custom_call.1']
    #allocation4 [shape = 's32[1]{0}', space=sflag, size = 0x4, scoped, tag = 'scoped memory for tpu_custom_call.1']
    #allocation5 [shape = 'u8[262144]{0}', space=vmem, size = 0x40000, scoped, tag = 'input window, operand 1, single buffered']
    #allocation6 [shape = 's32[1]{0}', space=sflag, size = 0x4, scoped, tag = 'scoped memory for tpu_custom_call.1']
    #allocation7 [shape = 'u8[4096]{0}', space=vmem, size = 0x1000, scoped, tag = 'output window, operand 0, single buffered']
    %8 = vsyncpa [#allocation3], 0
    %9 = vsyncpa [#allocation6], 0
    %10 = vsyncpa [#allocation4], 0
    // Predicated region
    $region2: #{tpu_custom_call.1} parent=1 // pred_check
      _
    $region3: #{tpu_custom_call.1} parent=1 // pred_check_branch
      %12 = sbr.rel (0) target = $region5
    $region4: #{tpu_custom_call.1} parent=1 // pred_region
      %s14 = ssub.s32 128, 128
      %15 = vsyncadd [#allocation3], %s14
      %s17 = sshll.u32 [#allocation2], 4
      %s18 = int_to_ptr.vmem [resolvable:$true] %s17
      %20 = dma.hbm_to_vmem [thread:$0]  %s0, 128, %s18, [#allocation3]
    $region5: #{tpu_custom_call.1} parent=1 // pred_fallthru
      _
    // Predicated region
    $region6: #{tpu_custom_call.1} parent=1 // pred_check
      _
    $region7: #{tpu_custom_call.1} parent=1 // pred_check_branch
      %22 = sbr.rel (0) target = $region9
    $region8: #{tpu_custom_call.1} parent=1 // pred_region
      %s24 = ssub.s32 8192, 8192
      %25 = vsyncadd [#allocation6], %s24
      %s26 = sshll.u32 [#allocation5], 4
      %s27 = int_to_ptr.vmem [resolvable:$true] %s26
      %32 = dma.hbm_to_vmem [thread:$0]  %s1, 8192, %s27, [#allocation6], 512, 512, 32
    $region9: #{tpu_custom_call.1} parent=1 // pred_fallthru
      _
    // Predicated region
    $region10: #{tpu_custom_call.1} parent=1 // pred_check
      _
    $region11: #{tpu_custom_call.1} parent=1 // pred_check_branch
      %34 = sbr.rel (0) target = $region13
    $region12: #{tpu_custom_call.1} parent=1 // pred_region
      _
    $region13: #{tpu_custom_call.1} parent=1 // pred_fallthru
      _
    // Predicated region
    $region14: #{tpu_custom_call.1} parent=1 // pred_check
      _
    $region15: #{tpu_custom_call.1} parent=1 // pred_check_branch
      %36 = sbr.rel (0) target = $region17
    $region16: #{tpu_custom_call.1} parent=1 // pred_region
      %37 = dma.done [#allocation3], 128
    $region17: #{tpu_custom_call.1} parent=1 // pred_fallthru
      _
    // Predicated region
    $region18: #{tpu_custom_call.1} parent=1 // pred_check
      _
    $region19: #{tpu_custom_call.1} parent=1 // pred_check_branch
      %39 = sbr.rel (0) target = $region21
    $region20: #{tpu_custom_call.1} parent=1 // pred_region
      %40 = dma.done [#allocation6], 8192
    $region21: #{tpu_custom_call.1} parent=1 // pred_fallthru
      _
    %v41 = vld [vmem:[#allocation2] sm:$0xff]
    %v42 = vld [vmem:[#allocation5] sm:$0xff]
    %v43 = vld [vmem:[#allocation5 + $0x8] sm:$0xff]
    %v44 = vld [vmem:[#allocation5 + $0x10] sm:$0xff]
    %v45 = vld [vmem:[#allocation5 + $0x18] sm:$0xff]
    %v46 = vld [vmem:[#allocation5 + $0x20] sm:$0xff]
    %v47 = vld [vmem:[#allocation5 + $0x28] sm:$0xff]
    %v48 = vld [vmem:[#allocation5 + $0x30] sm:$0xff]
    %v49 = vld [vmem:[#allocation5 + $0x38] sm:$0xff]
    %v50 = vld [vmem:[#allocation5 + $0x40] sm:$0xff]
    %v51 = vld [vmem:[#allocation5 + $0x48] sm:$0xff]
    %v52 = vld [vmem:[#allocation5 + $0x50] sm:$0xff]
    %v53 = vld [vmem:[#allocation5 + $0x58] sm:$0xff]
    %v54 = vld [vmem:[#allocation5 + $0x60] sm:$0xff]
    %v55 = vld [vmem:[#allocation5 + $0x68] sm:$0xff]
    %v56 = vld [vmem:[#allocation5 + $0x70] sm:$0xff]
    %v57 = vld [vmem:[#allocation5 + $0x78] sm:$0xff]
    %v58 = vld [vmem:[#allocation5 + $0x80] sm:$0xff]
    %v59 = vld [vmem:[#allocation5 + $0x88] sm:$0xff]
    %v60 = vld [vmem:[#allocation5 + $0x90] sm:$0xff]
    %v61 = vld [vmem:[#allocation5 + $0x98] sm:$0xff]
    %v62 = vld [vmem:[#allocation5 + $0xa0] sm:$0xff]
    %v63 = vld [vmem:[#allocation5 + $0xa8] sm:$0xff]
    %v64 = vld [vmem:[#allocation5 + $0xb0] sm:$0xff]
    %v65 = vld [vmem:[#allocation5 + $0xb8] sm:$0xff]
    %v66 = vld [vmem:[#allocation5 + $0xc0] sm:$0xff]
    %v67 = vld [vmem:[#allocation5 + $0xc8] sm:$0xff]
    %v68 = vld [vmem:[#allocation5 + $0xd0] sm:$0xff]
    %v69 = vld [vmem:[#allocation5 + $0xd8] sm:$0xff]
    %v70 = vld [vmem:[#allocation5 + $0xe0] sm:$0xff]
    %v71 = vld [vmem:[#allocation5 + $0xe8] sm:$0xff]
    %v72 = vld [vmem:[#allocation5 + $0xf0] sm:$0xff]
    %v73 = vld [vmem:[#allocation5 + $0xf8] sm:$0xff]
    %v74 = vld [vmem:[#allocation5 + $0x100] sm:$0xff]
    %v75 = vld [vmem:[#allocation5 + $0x108] sm:$0xff]
    %v76 = vld [vmem:[#allocation5 + $0x110] sm:$0xff]
    %v77 = vld [vmem:[#allocation5 + $0x118] sm:$0xff]
    %v78 = vld [vmem:[#allocation5 + $0x120] sm:$0xff]
    %v79 = vld [vmem:[#allocation5 + $0x128] sm:$0xff]
    %v80 = vld [vmem:[#allocation5 + $0x130] sm:$0xff]
    %v81 = vld [vmem:[#allocation5 + $0x138] sm:$0xff]
    %v82 = vld [vmem:[#allocation5 + $0x140] sm:$0xff]
    %v83 = vld [vmem:[#allocation5 + $0x148] sm:$0xff]
    %v84 = vld [vmem:[#allocation5 + $0x150] sm:$0xff]
    %v85 = vld [vmem:[#allocation5 + $0x158] sm:$0xff]
    %v86 = vld [vmem:[#allocation5 + $0x160] sm:$0xff]
    %v87 = vld [vmem:[#allocation5 + $0x168] sm:$0xff]
    %v88 = vld [vmem:[#allocation5 + $0x170] sm:$0xff]
    %v89 = vld [vmem:[#allocation5 + $0x178] sm:$0xff]
    %v90 = vld [vmem:[#allocation5 + $0x180] sm:$0xff]
    %v91 = vld [vmem:[#allocation5 + $0x188] sm:$0xff]
    %v92 = vld [vmem:[#allocation5 + $0x190] sm:$0xff]
    %v93 = vld [vmem:[#allocation5 + $0x198] sm:$0xff]
    %v94 = vld [vmem:[#allocation5 + $0x1a0] sm:$0xff]
    %v95 = vld [vmem:[#allocation5 + $0x1a8] sm:$0xff]
    %v96 = vld [vmem:[#allocation5 + $0x1b0] sm:$0xff]
    %v97 = vld [vmem:[#allocation5 + $0x1b8] sm:$0xff]
    %v98 = vld [vmem:[#allocation5 + $0x1c0] sm:$0xff]
    %v99 = vld [vmem:[#allocation5 + $0x1c8] sm:$0xff]
    %v100 = vld [vmem:[#allocation5 + $0x1d0] sm:$0xff]
    %v101 = vld [vmem:[#allocation5 + $0x1d8] sm:$0xff]
    %v102 = vld [vmem:[#allocation5 + $0x1e0] sm:$0xff]
    %v103 = vld [vmem:[#allocation5 + $0x1e8] sm:$0xff]
    %v104 = vld [vmem:[#allocation5 + $0x1f0] sm:$0xff]
    %v105 = vld [vmem:[#allocation5 + $0x1f8] sm:$0xff]
    %106 = vmatprep.subr.mxu0 %v43
    %107 = vmatpush1.msra.mxu0 %v42
    %108 = vmatprep.subr.mxu0 %v47
    %109 = vmatpush1.msra.mxu0 %v46
    %110 = vmatprep.subr.mxu0 %v51
    %111 = vmatpush1.msra.mxu0 %v50
    %112 = vmatprep.subr.mxu0 %v55
    %113 = vmatpush1.msra.mxu0 %v54
    %114 = vmatprep.subr.mxu0 %v59
    %115 = vmatpush1.msra.mxu0 %v58
    %116 = vmatprep.subr.mxu0 %v63
    %117 = vmatpush1.msra.mxu0 %v62
    %118 = vmatprep.subr.mxu0 %v67
    %119 = vmatpush1.msra.mxu0 %v66
    %120 = vmatprep.subr.mxu0 %v71
    %121 = vmatpush1.msra.mxu0 %v70
    %122 = vmatprep.subr.mxu0 %v75
    %123 = vmatpush1.msra.mxu0 %v74
    %124 = vmatprep.subr.mxu0 %v79
    %125 = vmatpush1.msra.mxu0 %v78
    %126 = vmatprep.subr.mxu0 %v83
    %127 = vmatpush1.msra.mxu0 %v82
    %128 = vmatprep.subr.mxu0 %v87
    %129 = vmatpush1.msra.mxu0 %v86
    %130 = vmatprep.subr.mxu0 %v91
    %131 = vmatpush1.msra.mxu0 %v90
    %132 = vmatprep.subr.mxu0 %v95
    %133 = vmatpush1.msra.mxu0 %v94
    %134 = vmatprep.subr.mxu0 %v99
    %135 = vmatpush1.msra.mxu0 %v98
    %136 = vmatprep.subr.mxu0 %v103
    %137 = vmatpush1.msra.mxu0 %v102
    %138 = vmatprep.subr.mxu0 0.0
    %139 = vmatpush1.msra.mxu0 0.0
    %140 = vmatprep.subr.mxu0 0.0
    %141 = vmatpush1.msra.mxu0 0.0
    %142 = vmatprep.subr.mxu0 0.0
    %143 = vmatpush1.msra.mxu0 0.0
    %144 = vmatprep.subr.mxu0 0.0
    %145 = vmatpush1.msra.mxu0 0.0
    %146 = vmatprep.subr.mxu0 0.0
    %147 = vmatpush1.msra.mxu0 0.0
    %148 = vmatprep.subr.mxu0 0.0
    %149 = vmatpush1.msra.mxu0 0.0
    %150 = vmatprep.subr.mxu0 0.0
    %151 = vmatpush1.msra.mxu0 0.0
    %152 = vmatprep.subr.mxu0 0.0
    %153 = vmatpush1.msra.mxu0 0.0
    %154 = vmatprep.subr.mxu0 0.0
    %155 = vmatpush1.msra.mxu0 0.0
    %156 = vmatprep.subr.mxu0 0.0
    %157 = vmatpush1.msra.mxu0 0.0
    %158 = vmatprep.subr.mxu0 0.0
    %159 = vmatpush1.msra.mxu0 0.0
    %160 = vmatprep.subr.mxu0 0.0
    %161 = vmatpush1.msra.mxu0 0.0
    %162 = vmatprep.subr.mxu0 0.0
    %163 = vmatpush1.msra.mxu0 0.0
    %164 = vmatprep.subr.mxu0 0.0
    %165 = vmatpush1.msra.mxu0 0.0
    %166 = vmatprep.subr.mxu0 0.0
    %167 = vmatpush1.msra.mxu0 0.0
    %168 = vmatprep.subr.mxu0 0.0
    %169 = vmatpush1.msra.mxu0 0.0
    %170 = vmatprep.mubr.f32.mxu0 0.0
    %171 = vmatmul.mubr.f32.gmra.mrb[0].mxu0 %v41
    %v172 = vpop.f32.mrb[0].mxu0
    %v173 = vadd.f32 0.0, %v172
    %v174 = vpop.f32.mrb[0].mxu0
    %v175 = vadd.f32 0.0, %v174
    %176 = vdwg.mxu0
    %177 = vmatprep.subr.mxu0 %v45
    %178 = vmatpush1.msra.mxu0 %v44
    %179 = vmatprep.subr.mxu0 %v49
    %180 = vmatpush1.msra.mxu0 %v48
    %181 = vmatprep.subr.mxu0 %v53
    %182 = vmatpush1.msra.mxu0 %v52
    %183 = vmatprep.subr.mxu0 %v57
    %184 = vmatpush1.msra.mxu0 %v56
    %185 = vmatprep.subr.mxu0 %v61
    %186 = vmatpush1.msra.mxu0 %v60
    %187 = vmatprep.subr.mxu0 %v65
    %188 = vmatpush1.msra.mxu0 %v64
    %189 = vmatprep.subr.mxu0 %v69
    %190 = vmatpush1.msra.mxu0 %v68
    %191 = vmatprep.subr.mxu0 %v73
    %192 = vmatpush1.msra.mxu0 %v72
    %193 = vmatprep.subr.mxu0 %v77
    %194 = vmatpush1.msra.mxu0 %v76
    %195 = vmatprep.subr.mxu0 %v81
    %196 = vmatpush1.msra.mxu0 %v80
    %197 = vmatprep.subr.mxu0 %v85
    %198 = vmatpush1.msra.mxu0 %v84
    %199 = vmatprep.subr.mxu0 %v89
    %200 = vmatpush1.msra.mxu0 %v88
    %201 = vmatprep.subr.mxu0 %v93
    %202 = vmatpush1.msra.mxu0 %v92
    %203 = vmatprep.subr.mxu0 %v97
    %204 = vmatpush1.msra.mxu0 %v96
    %205 = vmatprep.subr.mxu0 %v101
    %206 = vmatpush1.msra.mxu0 %v100
    %207 = vmatprep.subr.mxu0 %v105
    %208 = vmatpush1.msra.mxu0 %v104
    %209 = vmatprep.subr.mxu0 0.0
    %210 = vmatpush1.msra.mxu0 0.0
    %211 = vmatprep.subr.mxu0 0.0
    %212 = vmatpush1.msra.mxu0 0.0
    %213 = vmatprep.subr.mxu0 0.0
    %214 = vmatpush1.msra.mxu0 0.0
    %215 = vmatprep.subr.mxu0 0.0
    %216 = vmatpush1.msra.mxu0 0.0
    %217 = vmatprep.subr.mxu0 0.0
    %218 = vmatpush1.msra.mxu0 0.0
    %219 = vmatprep.subr.mxu0 0.0
    %220 = vmatpush1.msra.mxu0 0.0
    %221 = vmatprep.subr.mxu0 0.0
    %222 = vmatpush1.msra.mxu0 0.0
    %223 = vmatprep.subr.mxu0 0.0
    %224 = vmatpush1.msra.mxu0 0.0
    %225 = vmatprep.subr.mxu0 0.0
    %226 = vmatpush1.msra.mxu0 0.0
    %227 = vmatprep.subr.mxu0 0.0
    %228 = vmatpush1.msra.mxu0 0.0
    %229 = vmatprep.subr.mxu0 0.0
    %230 = vmatpush1.msra.mxu0 0.0
    %231 = vmatprep.subr.mxu0 0.0
    %232 = vmatpush1.msra.mxu0 0.0
    %233 = vmatprep.subr.mxu0 0.0
    %234 = vmatpush1.msra.mxu0 0.0
    %235 = vmatprep.subr.mxu0 0.0
    %236 = vmatpush1.msra.mxu0 0.0
    %237 = vmatprep.subr.mxu0 0.0
    %238 = vmatpush1.msra.mxu0 0.0
    %239 = vmatprep.subr.mxu0 0.0
    %240 = vmatpush1.msra.mxu0 0.0
    %241 = vmatprep.mubr.f32.mxu0 0.0
    %242 = vmatmul.mubr.f32.gmra.mrb[0].mxu0 %v41
    %v243 = vpop.f32.mrb[0].mxu0
    %v244 = vadd.f32 0.0, %v243
    %v245 = vpop.f32.mrb[0].mxu0
    %v246 = vadd.f32 0.0, %v245
    %247 = vdwg.mxu0
    %v248 = vld [vmem:[%s2] sm:$0x3]
    %v250 = vlaneseq
    %v251 = vshrl.u32 %v250, 7
    %v252 = vsub.s32 0, %v251
    %v253 = vrot.slane %v248, %v252
    %v254 = vlaneseq
    %v255 = vshrl.u32 %v254, 7
    %v256 = vsub.s32 1, %v255
    %v257 = vrot.slane %v248, %v256
    %v260 = vadd.f32 %v244, %v253
    %v261 = vadd.f32 %v246, %v257
    %262 = vmatprep.subr.mxu0 %v261
    %263 = vmatpush1.xpose.msra.mxu0 %v260
    %264 = vmatprep.subr.mxu0 0.0
    %265 = vmatpush1.xpose.msra.mxu0 0.0
    %266 = vmatprep.subr.mxu0 0.0
    %267 = vmatpush1.xpose.msra.mxu0 0.0
    %268 = vmatprep.subr.mxu0 0.0
    %269 = vmatpush1.xpose.msra.mxu0 0.0
    %270 = vmatprep.subr.mxu0 0.0
    %271 = vmatpush1.xpose.msra.mxu0 0.0
    %272 = vmatprep.subr.mxu0 0.0
    %273 = vmatpush1.xpose.msra.mxu0 0.0
    %274 = vmatprep.subr.mxu0 0.0
    %275 = vmatpush1.xpose.msra.mxu0 0.0
    %276 = vmatprep.subr.mxu0 0.0
    %277 = vmatpush1.xpose.msra.mxu0 0.0
    %278 = vmatprep.subr.mxu0 0.0
    %279 = vmatpush1.xpose.msra.mxu0 0.0
    %280 = vmatprep.subr.mxu0 0.0
    %281 = vmatpush1.xpose.msra.mxu0 0.0
    %282 = vmatprep.subr.mxu0 0.0
    %283 = vmatpush1.xpose.msra.mxu0 0.0
    %284 = vmatprep.subr.mxu0 0.0
    %285 = vmatpush1.xpose.msra.mxu0 0.0
    %286 = vmatprep.subr.mxu0 0.0
    %287 = vmatpush1.xpose.msra.mxu0 0.0
    %288 = vmatprep.subr.mxu0 0.0
    %289 = vmatpush1.xpose.msra.mxu0 0.0
    %290 = vmatprep.subr.mxu0 0.0
    %291 = vmatpush1.xpose.msra.mxu0 0.0
    %292 = vmatprep.subr.mxu0 0.0
    %293 = vmatpush1.xpose.msra.mxu0 0.0
    %294 = vmatprep.subr.mxu0 0.0
    %295 = vmatpush1.xpose.msra.mxu0 0.0
    %296 = vmatprep.subr.mxu0 0.0
    %297 = vmatpush1.xpose.msra.mxu0 0.0
    %298 = vmatprep.subr.mxu0 0.0
    %299 = vmatpush1.xpose.msra.mxu0 0.0
    %300 = vmatprep.subr.mxu0 0.0
    %301 = vmatpush1.xpose.msra.mxu0 0.0
    %302 = vmatprep.subr.mxu0 0.0
    %303 = vmatpush1.xpose.msra.mxu0 0.0
    %304 = vmatprep.subr.mxu0 0.0
    %305 = vmatpush1.xpose.msra.mxu0 0.0
    %306 = vmatprep.subr.mxu0 0.0
    %307 = vmatpush1.xpose.msra.mxu0 0.0
    %308 = vmatprep.subr.mxu0 0.0
    %309 = vmatpush1.xpose.msra.mxu0 0.0
    %310 = vmatprep.subr.mxu0 0.0
    %311 = vmatpush1.xpose.msra.mxu0 0.0
    %312 = vmatprep.subr.mxu0 0.0
    %313 = vmatpush1.xpose.msra.mxu0 0.0
    %314 = vmatprep.subr.mxu0 0.0
    %315 = vmatpush1.xpose.msra.mxu0 0.0
    %316 = vmatprep.subr.mxu0 0.0
    %317 = vmatpush1.xpose.msra.mxu0 0.0
    %318 = vmatprep.subr.mxu0 0.0
    %319 = vmatpush1.xpose.msra.mxu0 0.0
    %320 = vmatprep.subr.mxu0 0.0
    %321 = vmatpush1.xpose.msra.mxu0 0.0
    %322 = vmatprep.subr.mxu0 0.0
    %323 = vmatpush1.xpose.msra.mxu0 0.0
    %324 = vmatprep.subr.mxu0 0.0
    %325 = vmatpush1.xpose.msra.mxu0 0.0
    %326 = vmatprep.mubr.f32.mxu0 %v175
    %327 = vmatmul.mubr.f32.gmra.mrb[0].mxu0 %v173
    %v328 = vpop.f32.mrb[0].mxu0
    %v329 = vadd.f32 0.0, %v328
    %v330 = vpop.f32.mrb[0].mxu0
    %331 = vdwg.mxu0
    %vm332 = vcmask 64512
    %333 = vst.msk [vmem:[#allocation7] sm:$0xff] %vm332, %v329
    // Predicated region
    $region22: #{tpu_custom_call.1} parent=1 // pred_check
      _
    $region23: #{tpu_custom_call.1} parent=1 // pred_check_branch
      %335 = sbr.rel (0) target = $region25
    $region24: #{tpu_custom_call.1} parent=1 // pred_region
      %s337 = ssub.s32 128, 128
      %338 = vsyncadd [#allocation4], %s337
      %s340 = sshll.u32 [#allocation7], 4
      %s341 = int_to_ptr.vmem [resolvable:$true] %s340
      %343 = dma.vmem_to_hbm [thread:$0]  %s341, 128, %s3, [#allocation4]
    $region25: #{tpu_custom_call.1} parent=1 // pred_fallthru
      _
    // Predicated region
    $region26: #{tpu_custom_call.1} parent=1 // pred_check
      _
    $region27: #{tpu_custom_call.1} parent=1 // pred_check_branch
      %345 = sbr.rel (0) target = $region29
    $region28: #{tpu_custom_call.1} parent=1 // pred_region
      %346 = dma.done [#allocation4], 128
    $region29: #{tpu_custom_call.1} parent=1 // pred_fallthru
      _
    %347 = vsyncpa [#allocation3], 1
    %348 = vsyncpa [#allocation6], 1
    %349 = vsyncpa [#allocation4], 1

</llo_original>
